<compile_context>
chip_gen: v7x
topology: tpu7x:2x2x1
jax: 0.10.0
libtpu: 0.0.40
codegen_flags: <defaults>
</compile_context>

<pallas_src>
import jax
import jax.numpy as jnp
import numpy as np
from jax.experimental import pallas as pl
from jax.experimental.pallas import tpu as pltpu

EPS = 1e-5        # PyTorch BatchNorm1d default eps
OUT_PAD = 128     # pad final out-dim (1) to a full lane width for a dense MXU pass


# ------------------------------- Pallas kernel ------------------------------

def _fused_net_kernel(x_ref, *refs):
    """Entire forward pass in one kernel.

    refs = (w_0, ..., w_{L-1}, w_out_pad, vec, o_ref)
      w_i       : (in_i, out_i)   BN-scale-folded hidden weights
      w_out_pad : (in_L, OUT_PAD) final weight, zero-padded to 128 lanes
      vec       : (1, sum(out_i) + OUT_PAD) concatenated shifts + padded final bias
                  (all offsets are multiples of 128 -> lane-aligned static slices)

    Hidden layer i:  y = relu(y @ w_i + shift_i)   (BN + bias folded into w_i/shift_i)
    Final layer:     o = (y @ w_out_pad + b_out_pad)[:, :1]
    Dropout is identity in inference mode (no op in the kernel).
    """
    o_ref = refs[-1]
    vec_ref = refs[-2]
    w_out_ref = refs[-3]
    hidden_w_refs = refs[:-3]

    y = x_ref[...]
    off = 0
    for w_ref in hidden_w_refs:
        w = w_ref[...]
        n = w.shape[1]
        s = vec_ref[:, off:off + n]          # (1, n), lane-aligned static slice
        off += n
        y = jnp.maximum(
            jnp.dot(y, w, preferred_element_type=jnp.float32) + s, 0.0)

    w_out = w_out_ref[...]
    b_out = vec_ref[:, off:off + w_out.shape[1]]   # (1, OUT_PAD)
    res = jnp.dot(y, w_out, preferred_element_type=jnp.float32) + b_out
    # Only column 0 carries the real output; padded columns are discarded here.
    o_ref[...] = res[:, :1].astype(o_ref.dtype)


def net_forward(x, flat_params):
    """Single fused pallas_call over the whole network; returns (B, 1)."""
    B = x.shape[0]
    n_hidden = len(flat_params) - 2

    # Advisory cost estimate (scheduling hint only).
    flops = 0
    bytes_accessed = x.size * x.dtype.itemsize + B * 4
    for p in flat_params:
        bytes_accessed += p.size * p.dtype.itemsize
    for w in list(flat_params[:n_hidden]) + [flat_params[n_hidden]]:
        flops += 2 * B * w.shape[0] * w.shape[1]
    cost = pl.CostEstimate(flops=flops, transcendentals=0,
                           bytes_accessed=bytes_accessed)

    vmem = pl.BlockSpec(memory_space=pltpu.MemorySpace.VMEM)
    return pl.pallas_call(
        _fused_net_kernel,
        out_shape=jax.ShapeDtypeStruct((B, 1), jnp.float32),
        in_specs=[vmem] * (1 + len(flat_params)),
        out_specs=vmem,
        cost_estimate=cost,
    )(x, *flat_params)


net_forward = jax.jit(net_forward)


# ---------------------------- parameter handling ----------------------------

def init_params(key, input_dim, num_hidden_layers):
    """Deterministic synthetic parameters matching the PyTorch module's shapes.

    Linear weights are stored pre-transposed as (in_features, out_features).
    """
    hidden_params = []
    hidden = 512
    in_dim = input_dim
    for _ in range(num_hidden_layers):
        key, k1, k2, k3, k4, k5, k6 = jax.random.split(key, 7)
        w = jax.random.normal(k1, (in_dim, hidden), jnp.float32) / np.sqrt(in_dim)
        b = 0.1 * jax.random.normal(k2, (1, hidden), jnp.float32)
        gamma = 1.0 + 0.1 * jax.random.normal(k3, (1, hidden), jnp.float32)
        beta = 0.1 * jax.random.normal(k4, (1, hidden), jnp.float32)
        run_mean = 0.1 * jax.random.normal(k5, (1, hidden), jnp.float32)
        run_var = jnp.abs(1.0 + 0.1 * jax.random.normal(k6, (1, hidden), jnp.float32))
        hidden_params.append((w, b, gamma, beta, run_mean, run_var))
        in_dim = hidden
        hidden //= 2
    key, k1, k2 = jax.random.split(key, 3)
    w_out = jax.random.normal(k1, (in_dim, 1), jnp.float32) / np.sqrt(in_dim)
    b_out = 0.1 * jax.random.normal(k2, (1, 1), jnp.float32)
    return hidden_params, (w_out, b_out)


def prepare_params(hidden_params, final_params):
    """One-time prep (NOT in the per-call path):
      * fold eval-mode BatchNorm + Linear bias into weights / shift vectors,
      * pad the final (in, 1) linear to 128 lanes,
      * concatenate all shift vectors + padded final bias into ONE lane-aligned
        (1, 1024) buffer so the kernel issues fewer HBM->VMEM DMAs.
    Returns [w_0, ..., w_{L-1}, w_out_pad, vec]."""
    weights, shifts = [], []
    for (w, b, gamma, beta, mean, var) in hidden_params:
        scale = gamma / jnp.sqrt(var + EPS)           # (1, out)
        weights.append((w * scale).astype(jnp.float32))
        shifts.append(((b - mean) * scale + beta).astype(jnp.float32))
    w_out, b_out = final_params
    w_pad = jnp.zeros((w_out.shape[0], OUT_PAD), jnp.float32).at[:, :w_out.shape[1]].set(w_out)
    b_pad = jnp.zeros((1, OUT_PAD), jnp.float32).at[:, :b_out.shape[1]].set(b_out)
    vec = jnp.concatenate(shifts + [b_pad], axis=1)   # (1, 512+256+128+128) = (1, 1024)
    flat = weights + [w_pad, vec]
    return [jax.device_put(p) for p in flat]


# ------------------------------- pure-JAX ref --------------------------------

def net_forward_ref(x, hidden_params, final_params):
    """Pure-JAX reference mirroring the PyTorch eval-mode forward."""
    for (w, b, gamma, beta, mean, var) in hidden_params:
        y = x @ w + b
        y = (y - mean) / jnp.sqrt(var + EPS) * gamma + beta
        x = jnp.maximum(y, 0.0)
    w_out, b_out = final_params
    return x @ w_out + b_out


# ----------------------------------- main ------------------------------------

if __name__ == "__main__":
    INPUT_DIM = 32
    NUM_HIDDEN_LAYERS = 3     # hidden dims: 512 -> 256 -> 128 -> Linear(128, 1)
    DROPOUT_RATE = 0.5        # inference mode => identity (no RNG needed)
    BATCH = 16

    key = jax.random.PRNGKey(0)
    key, kx, kp = jax.random.split(key, 3)
    x = jax.random.normal(kx, (BATCH, INPUT_DIM), jnp.float32)
    hidden_params, final_params = init_params(kp, INPUT_DIM, NUM_HIDDEN_LAYERS)

    # One-time BN/bias folding + lane padding + shift packing (not per-call).
    flat_params = prepare_params(hidden_params, final_params)

    out = net_forward(x, flat_params)
    out = jax.block_until_ready(out)

    ref = net_forward_ref(x, hidden_params, final_params)
    assert out.shape == (BATCH, 1), out.shape
    np.testing.assert_allclose(np.asarray(out), np.asarray(ref), rtol=1e-4, atol=1e-4)

    print("KERNEL_OK")
</pallas_src>

<mosaic_0001>
module attributes {stable_mosaic.version = 11 : i64} {
  func.func @_fused_net_kernel(%arg0: memref<16x32xf32, #tpu.memory_space<vmem>>, %arg1: memref<32x512xf32, #tpu.memory_space<vmem>>, %arg2: memref<512x256xf32, #tpu.memory_space<vmem>>, %arg3: memref<256x128xf32, #tpu.memory_space<vmem>>, %arg4: memref<128x128xf32, #tpu.memory_space<vmem>>, %arg5: memref<1x1024xf32, #tpu.memory_space<vmem>>, %arg6: memref<16x1xf32, #tpu.memory_space<vmem>>) attributes {dimension_semantics = [], scalar_prefetch = 0 : i64, scratch_operands = 0 : i64, tpu.core_type = #tpu.core_type<tc>} {
    %c0 = arith.constant 0 : index
    %c0_0 = arith.constant 0 : index
    %0 = vector.load %arg0[%c0, %c0_0] : memref<16x32xf32, #tpu.memory_space<vmem>>, vector<16x32xf32>
    %c0_1 = arith.constant 0 : index
    %c0_2 = arith.constant 0 : index
    %1 = vector.load %arg1[%c0_1, %c0_2] : memref<32x512xf32, #tpu.memory_space<vmem>>, vector<32x512xf32>
    %c0_3 = arith.constant 0 : index
    %c0_4 = arith.constant 0 : index
    %2 = vector.load %arg5[%c0_3, %c0_4] : memref<1x1024xf32, #tpu.memory_space<vmem>>, vector<1x512xf32>
    %cst = arith.constant dense<0.000000e+00> : vector<16x512xf32>
    %3 = tpu.matmul %0, %1, %cst {dimension_numbers = #tpu.dot_dimension_numbers<[1], [0], [0], [1], [0, 0, 1, 1], [], []>} : vector<16x32xf32>, vector<32x512xf32>, vector<16x512xf32> -> vector<16x512xf32>
    %4 = vector.broadcast %2 : vector<1x512xf32> to vector<16x512xf32>
    %5 = arith.addf %3, %4 : vector<16x512xf32>
    %cst_5 = arith.constant 0.000000e+00 : f32
    %6 = vector.broadcast %cst_5 : f32 to vector<16x512xf32>
    %7 = arith.maximumf %5, %6 : vector<16x512xf32>
    %c0_6 = arith.constant 0 : index
    %c0_7 = arith.constant 0 : index
    %8 = vector.load %arg2[%c0_6, %c0_7] : memref<512x256xf32, #tpu.memory_space<vmem>>, vector<512x256xf32>
    %c0_8 = arith.constant 0 : index
    %c512 = arith.constant 512 : index
    %9 = vector.load %arg5[%c0_8, %c512] : memref<1x1024xf32, #tpu.memory_space<vmem>>, vector<1x256xf32>
    %cst_9 = arith.constant dense<0.000000e+00> : vector<16x256xf32>
    %10 = tpu.matmul %7, %8, %cst_9 {dimension_numbers = #tpu.dot_dimension_numbers<[1], [0], [0], [1], [0, 0, 1, 1], [], []>} : vector<16x512xf32>, vector<512x256xf32>, vector<16x256xf32> -> vector<16x256xf32>
    %11 = vector.broadcast %9 : vector<1x256xf32> to vector<16x256xf32>
    %12 = arith.addf %10, %11 : vector<16x256xf32>
    %cst_10 = arith.constant 0.000000e+00 : f32
    %13 = vector.broadcast %cst_10 : f32 to vector<16x256xf32>
    %14 = arith.maximumf %12, %13 : vector<16x256xf32>
    %c0_11 = arith.constant 0 : index
    %c0_12 = arith.constant 0 : index
    %15 = vector.load %arg3[%c0_11, %c0_12] : memref<256x128xf32, #tpu.memory_space<vmem>>, vector<256x128xf32>
    %c0_13 = arith.constant 0 : index
    %c768 = arith.constant 768 : index
    %16 = vector.load %arg5[%c0_13, %c768] : memref<1x1024xf32, #tpu.memory_space<vmem>>, vector<1x128xf32>
    %cst_14 = arith.constant dense<0.000000e+00> : vector<16x128xf32>
    %17 = tpu.matmul %14, %15, %cst_14 {dimension_numbers = #tpu.dot_dimension_numbers<[1], [0], [0], [1], [0, 0, 1, 1], [], []>} : vector<16x256xf32>, vector<256x128xf32>, vector<16x128xf32> -> vector<16x128xf32>
    %18 = vector.broadcast %16 : vector<1x128xf32> to vector<16x128xf32>
    %19 = arith.addf %17, %18 : vector<16x128xf32>
    %cst_15 = arith.constant 0.000000e+00 : f32
    %20 = vector.broadcast %cst_15 : f32 to vector<16x128xf32>
    %21 = arith.maximumf %19, %20 : vector<16x128xf32>
    %c0_16 = arith.constant 0 : index
    %c0_17 = arith.constant 0 : index
    %22 = vector.load %arg4[%c0_16, %c0_17] : memref<128x128xf32, #tpu.memory_space<vmem>>, vector<128x128xf32>
    %c0_18 = arith.constant 0 : index
    %c896 = arith.constant 896 : index
    %23 = vector.load %arg5[%c0_18, %c896] : memref<1x1024xf32, #tpu.memory_space<vmem>>, vector<1x128xf32>
    %cst_19 = arith.constant dense<0.000000e+00> : vector<16x128xf32>
    %24 = tpu.matmul %21, %22, %cst_19 {dimension_numbers = #tpu.dot_dimension_numbers<[1], [0], [0], [1], [0, 0, 1, 1], [], []>} : vector<16x128xf32>, vector<128x128xf32>, vector<16x128xf32> -> vector<16x128xf32>
    %25 = vector.broadcast %23 : vector<1x128xf32> to vector<16x128xf32>
    %26 = arith.addf %24, %25 : vector<16x128xf32>
    %27 = vector.extract_strided_slice %26 {offsets = [0, 0], sizes = [16, 1], strides = [1, 1]} : vector<16x128xf32> to vector<16x1xf32>
    %c0_20 = arith.constant 0 : index
    %c0_21 = arith.constant 0 : index
    %28 = vector.load %arg6[%c0_20, %c0_21] : memref<16x1xf32, #tpu.memory_space<vmem>>, vector<16x1xf32>
    tpu.vector_store %arg6[%c0_20, %c0_21], %27 {strides = array<i32>} : memref<16x1xf32, #tpu.memory_space<vmem>>, vector<16x1xf32>,
    return
  }
}

</mosaic_0001>

<llo_original>
// kernel: net_forward.1
$region0: #{net_forward.1}
  #allocation0 [shape = 'u32[]', space=smem, size = 0x4, offset = 0x4, fixed_abs, tag = 'smem constant byte address 0x4 - core index']
  #allocation1 [shape = 'u32[144,128]{1,0:T(1,128)}', space=vmem, size = 0x12000, scoped, tag = 'internal scratch']
  %s0 = inlined_call_operand.hbm [shape: f32[16,32], index: 0, kind: input, shape index: {}]
  %s1 = inlined_call_operand.hbm [shape: f32[32,512], index: 1, kind: input, shape index: {}]
  %s2 = inlined_call_operand.hbm [shape: f32[512,256], index: 2, kind: input, shape index: {}]
  %s3 = inlined_call_operand.hbm [shape: f32[256,128], index: 3, kind: input, shape index: {}]
  %s4 = inlined_call_operand.hbm [shape: f32[128,128], index: 4, kind: input, shape index: {}]
  %s5 = inlined_call_operand.vmem [shape: f32[1,1024], index: 5, kind: input, shape index: {}]
  %s6 = inlined_call_operand.vmem [shape: f32[16,1], index: 6, kind: output, shape index: {}]
  %s7 = sld [smem:[#allocation0]]
  $region54: #{net_forward.1} parent=0
    _
  %s9 = ssub.s32 1, %s7
  %s10 = scalar_select 0, %s9, %s7
  $region1: #{net_forward.1} parent=0
    #allocation2 [shape = 'u8[8192]{0}', space=vmem, size = 0x2000, scoped, tag = 'input window, operand 0, single buffered']
    #allocation3 [shape = 's32[1]{0}', space=sflag, size = 0x4, scoped, tag = 'scoped memory for net_forward.1']
    #allocation4 [shape = 'u8[65536]{0}', space=vmem, size = 0x10000, scoped, tag = 'input window, operand 1, single buffered']
    #allocation5 [shape = 's32[1]{0}', space=sflag, size = 0x4, scoped, tag = 'scoped memory for net_forward.1']
    #allocation6 [shape = 'u8[524288]{0}', space=vmem, size = 0x80000, scoped, tag = 'input window, operand 2, single buffered']
    #allocation7 [shape = 'u8[131072]{0}', space=vmem, size = 0x20000, scoped, tag = 'input window, operand 3, single buffered']
    #allocation8 [shape = 's32[1]{0}', space=sflag, size = 0x4, scoped, tag = 'scoped memory for net_forward.1']
    #allocation9 [shape = 'u8[65536]{0}', space=vmem, size = 0x10000, scoped, tag = 'input window, operand 4, single buffered']
    %11 = vsyncpa [#allocation3], 0
    %12 = vsyncpa [#allocation5], 0
    %13 = vsyncpa [#allocation8], 0
    // Predicated region
    $region2: #{net_forward.1} parent=1 // pred_check
      _
    $region3: #{net_forward.1} parent=1 // pred_check_branch
      %15 = sbr.rel (0) target = $region5
    $region4: #{net_forward.1} parent=1 // pred_region
      %s17 = ssub.s32 256, 256
      %18 = vsyncadd [#allocation3], %s17
      %s19 = sshll.u32 [#allocation2], 4
      %s20 = int_to_ptr.vmem [resolvable:$true] %s19
      %25 = dma.hbm_to_vmem [thread:$0]  %s0, 256, %s20, [#allocation3], 128, 128, 8
    $region5: #{net_forward.1} parent=1 // pred_fallthru
      _
    // Predicated region
    $region6: #{net_forward.1} parent=1 // pred_check
      _
    $region7: #{net_forward.1} parent=1 // pred_check_branch
      %27 = sbr.rel (0) target = $region9
    $region8: #{net_forward.1} parent=1 // pred_region
      %s29 = ssub.s32 2048, 2048
      %30 = vsyncadd [#allocation5], %s29
      %s31 = sshll.u32 [#allocation4], 4
      %s32 = int_to_ptr.vmem [resolvable:$true] %s31
      %37 = dma.hbm_to_vmem [thread:$0]  %s1, 2048, %s32, [#allocation5], 512, 512, 32
    $region9: #{net_forward.1} parent=1 // pred_fallthru
      _
    // Predicated region
    $region10: #{net_forward.1} parent=1 // pred_check
      _
    $region11: #{net_forward.1} parent=1 // pred_check_branch
      %39 = sbr.rel (0) target = $region13
    $region12: #{net_forward.1} parent=1 // pred_region
      %s41 = ssub.s32 16384, 16384
      %42 = vsyncadd [#allocation5], %s41
      %s43 = sshll.u32 [#allocation6], 4
      %s44 = int_to_ptr.vmem [resolvable:$true] %s43
      %49 = dma.hbm_to_vmem [thread:$0]  %s2, 16384, %s44, [#allocation5], 256, 256, 16
    $region13: #{net_forward.1} parent=1 // pred_fallthru
      _
    // Predicated region
    $region14: #{net_forward.1} parent=1 // pred_check
      _
    $region15: #{net_forward.1} parent=1 // pred_check_branch
      %51 = sbr.rel (0) target = $region17
    $region16: #{net_forward.1} parent=1 // pred_region
      %s53 = ssub.s32 4096, 4096
      %54 = vsyncadd [#allocation8], %s53
      %s55 = sshll.u32 [#allocation7], 4
      %s56 = int_to_ptr.vmem [resolvable:$true] %s55
      %61 = dma.hbm_to_vmem [thread:$0]  %s3, 4096, %s56, [#allocation8], 128, 128, 8
    $region17: #{net_forward.1} parent=1 // pred_fallthru
      _
    // Predicated region
    $region18: #{net_forward.1} parent=1 // pred_check
      _
    $region19: #{net_forward.1} parent=1 // pred_check_branch
      %63 = sbr.rel (0) target = $region21
    $region20: #{net_forward.1} parent=1 // pred_region
      %s65 = ssub.s32 2048, 2048
      %66 = vsyncadd [#allocation8], %s65
      %s67 = sshll.u32 [#allocation9], 4
      %s68 = int_to_ptr.vmem [resolvable:$true] %s67
      %73 = dma.hbm_to_vmem [thread:$0]  %s4, 2048, %s68, [#allocation8], 128, 128, 8
    $region21: #{net_forward.1} parent=1 // pred_fallthru
      _
    // Predicated region
    $region22: #{net_forward.1} parent=1 // pred_check
      _
    $region23: #{net_forward.1} parent=1 // pred_check_branch
      %75 = sbr.rel (0) target = $region25
    $region24: #{net_forward.1} parent=1 // pred_region
      _
    $region25: #{net_forward.1} parent=1 // pred_fallthru
      _
    // Predicated region
    $region26: #{net_forward.1} parent=1 // pred_check
      _
    $region27: #{net_forward.1} parent=1 // pred_check_branch
      %77 = sbr.rel (0) target = $region29
    $region28: #{net_forward.1} parent=1 // pred_region
      %78 = dma.done [#allocation3], 256
    $region29: #{net_forward.1} parent=1 // pred_fallthru
      _
    // Predicated region
    $region30: #{net_forward.1} parent=1 // pred_check
      _
    $region31: #{net_forward.1} parent=1 // pred_check_branch
      %80 = sbr.rel (0) target = $region33
    $region32: #{net_forward.1} parent=1 // pred_region
      %81 = dma.done [#allocation5], 2048
    $region33: #{net_forward.1} parent=1 // pred_fallthru
      _
    // Predicated region
    $region34: #{net_forward.1} parent=1 // pred_check
      _
    $region35: #{net_forward.1} parent=1 // pred_check_branch
      %83 = sbr.rel (0) target = $region37
    $region36: #{net_forward.1} parent=1 // pred_region
      %84 = dma.done [#allocation5], 16384
    $region37: #{net_forward.1} parent=1 // pred_fallthru
      _
    // Predicated region
    $region38: #{net_forward.1} parent=1 // pred_check
      _
    $region39: #{net_forward.1} parent=1 // pred_check_branch
      %86 = sbr.rel (0) target = $region41
    $region40: #{net_forward.1} parent=1 // pred_region
      %87 = dma.done [#allocation8], 4096
    $region41: #{net_forward.1} parent=1 // pred_fallthru
      _
    // Predicated region
    $region42: #{net_forward.1} parent=1 // pred_check
      _
    $region43: #{net_forward.1} parent=1 // pred_check_branch
      %89 = sbr.rel (0) target = $region45
    $region44: #{net_forward.1} parent=1 // pred_region
      %90 = dma.done [#allocation8], 2048
    $region45: #{net_forward.1} parent=1 // pred_fallthru
      _
    %v91 = vld [vmem:[#allocation2] sm:$0xff]
    %v92 = vld [vmem:[#allocation2 + $0x8] sm:$0xff]
    %v93 = vld [vmem:[#allocation4] sm:$0xff]
    %v94 = vld [vmem:[#allocation4 + $0x8] sm:$0xff]
    %v95 = vld [vmem:[#allocation4 + $0x10] sm:$0xff]
    %v96 = vld [vmem:[#allocation4 + $0x18] sm:$0xff]
    %v97 = vld [vmem:[#allocation4 + $0x20] sm:$0xff]
    %v98 = vld [vmem:[#allocation4 + $0x28] sm:$0xff]
    %v99 = vld [vmem:[#allocation4 + $0x30] sm:$0xff]
    %v100 = vld [vmem:[#allocation4 + $0x38] sm:$0xff]
    %v101 = vld [vmem:[#allocation4 + $0x40] sm:$0xff]
    %v102 = vld [vmem:[#allocation4 + $0x48] sm:$0xff]
    %v103 = vld [vmem:[#allocation4 + $0x50] sm:$0xff]
    %v104 = vld [vmem:[#allocation4 + $0x58] sm:$0xff]
    %v105 = vld [vmem:[#allocation4 + $0x60] sm:$0xff]
    %v106 = vld [vmem:[#allocation4 + $0x68] sm:$0xff]
    %v107 = vld [vmem:[#allocation4 + $0x70] sm:$0xff]
    %v108 = vld [vmem:[#allocation4 + $0x78] sm:$0xff]
    %v109 = vld [vmem:[%s5] sm:$0xf]
    %v111 = vlaneseq
    %v112 = vshrl.u32 %v111, 7
    %v113 = vsub.s32 0, %v112
    %v114 = vrot.slane %v109, %v113
    %v115 = vlaneseq
    %v116 = vshrl.u32 %v115, 7
    %v117 = vsub.s32 1, %v116
    %v118 = vrot.slane %v109, %v117
    %v119 = vlaneseq
    %v120 = vshrl.u32 %v119, 7
    %v121 = vsub.s32 2, %v120
    %v122 = vrot.slane %v109, %v121
    %v123 = vlaneseq
    %v124 = vshrl.u32 %v123, 7
    %v125 = vsub.s32 3, %v124
    %v126 = vrot.slane %v109, %v125
    %vm131 = vcmask 261120
    %v133 = vsel %vm131, %v91, 0
    %v136 = vsel %vm131, %v92, 0
    %138 = vmatprep.subr.mxu0 %v94
    %139 = vmatpush1.msra.mxu0 %v93
    %140 = vmatprep.subr.mxu0 %v98
    %141 = vmatpush1.msra.mxu0 %v97
    %142 = vmatprep.subr.mxu0 %v102
    %143 = vmatpush1.msra.mxu0 %v101
    %144 = vmatprep.subr.mxu0 %v106
    %145 = vmatpush1.msra.mxu0 %v105
    %146 = vmatprep.subr.mxu0 0.0
    %147 = vmatpush1.msra.mxu0 0.0
    %148 = vmatprep.subr.mxu0 0.0
    %149 = vmatpush1.msra.mxu0 0.0
    %150 = vmatprep.subr.mxu0 0.0
    %151 = vmatpush1.msra.mxu0 0.0
    %152 = vmatprep.subr.mxu0 0.0
    %153 = vmatpush1.msra.mxu0 0.0
    %154 = vmatprep.subr.mxu0 0.0
    %155 = vmatpush1.msra.mxu0 0.0
    %156 = vmatprep.subr.mxu0 0.0
    %157 = vmatpush1.msra.mxu0 0.0
    %158 = vmatprep.subr.mxu0 0.0
    %159 = vmatpush1.msra.mxu0 0.0
    %160 = vmatprep.subr.mxu0 0.0
    %161 = vmatpush1.msra.mxu0 0.0
    %162 = vmatprep.subr.mxu0 0.0
    %163 = vmatpush1.msra.mxu0 0.0
    %164 = vmatprep.subr.mxu0 0.0
    %165 = vmatpush1.msra.mxu0 0.0
    %166 = vmatprep.subr.mxu0 0.0
    %167 = vmatpush1.msra.mxu0 0.0
    %168 = vmatprep.subr.mxu0 0.0
    %169 = vmatpush1.msra.mxu0 0.0
    %170 = vmatprep.subr.mxu0 0.0
    %171 = vmatpush1.msra.mxu0 0.0
    %172 = vmatprep.subr.mxu0 0.0
    %173 = vmatpush1.msra.mxu0 0.0
    %174 = vmatprep.subr.mxu0 0.0
    %175 = vmatpush1.msra.mxu0 0.0
    %176 = vmatprep.subr.mxu0 0.0
    %177 = vmatpush1.msra.mxu0 0.0
    %178 = vmatprep.subr.mxu0 0.0
    %179 = vmatpush1.msra.mxu0 0.0
    %180 = vmatprep.subr.mxu0 0.0
    %181 = vmatpush1.msra.mxu0 0.0
    %182 = vmatprep.subr.mxu0 0.0
    %183 = vmatpush1.msra.mxu0 0.0
    %184 = vmatprep.subr.mxu0 0.0
    %185 = vmatpush1.msra.mxu0 0.0
    %186 = vmatprep.subr.mxu0 0.0
    %187 = vmatpush1.msra.mxu0 0.0
    %188 = vmatprep.subr.mxu0 0.0
    %189 = vmatpush1.msra.mxu0 0.0
    %190 = vmatprep.subr.mxu0 0.0
    %191 = vmatpush1.msra.mxu0 0.0
    %192 = vmatprep.subr.mxu0 0.0
    %193 = vmatpush1.msra.mxu0 0.0
    %194 = vmatprep.subr.mxu0 0.0
    %195 = vmatpush1.msra.mxu0 0.0
    %196 = vmatprep.subr.mxu0 0.0
    %197 = vmatpush1.msra.mxu0 0.0
    %198 = vmatprep.subr.mxu0 0.0
    %199 = vmatpush1.msra.mxu0 0.0
    %200 = vmatprep.subr.mxu0 0.0
    %201 = vmatpush1.msra.mxu0 0.0
    %202 = vmatprep.mubr.f32.mxu0 0.0
    %203 = vmatmul.mubr.f32.gmra.mrb[0].mxu0 %v133
    %v204 = vpop.f32.mrb[0].mxu0
    %v205 = vadd.f32 %v114, %v204
    %v206 = vpop.f32.mrb[0].mxu0
    %v207 = vadd.f32 %v118, %v206
    %208 = vmatprep.mubr.f32.mxu0 0.0
    %209 = vmatmul.mubr.f32.gmra.mrb[0].mxu0 %v136
    %v210 = vpop.f32.mrb[0].mxu0
    %v211 = vadd.f32 %v114, %v210
    %v212 = vpop.f32.mrb[0].mxu0
    %v213 = vadd.f32 %v118, %v212
    %214 = vdwg.mxu0
    %215 = vmatprep.subr.mxu0 %v96
    %216 = vmatpush1.msra.mxu0 %v95
    %217 = vmatprep.subr.mxu0 %v100
    %218 = vmatpush1.msra.mxu0 %v99
    %219 = vmatprep.subr.mxu0 %v104
    %220 = vmatpush1.msra.mxu0 %v103
    %221 = vmatprep.subr.mxu0 %v108
    %222 = vmatpush1.msra.mxu0 %v107
    %223 = vmatprep.subr.mxu0 0.0
    %224 = vmatpush1.msra.mxu0 0.0
    %225 = vmatprep.subr.mxu0 0.0
    %226 = vmatpush1.msra.mxu0 0.0
    %227 = vmatprep.subr.mxu0 0.0
    %228 = vmatpush1.msra.mxu0 0.0
    %229 = vmatprep.subr.mxu0 0.0
    %230 = vmatpush1.msra.mxu0 0.0
    %231 = vmatprep.subr.mxu0 0.0
    %232 = vmatpush1.msra.mxu0 0.0
    %233 = vmatprep.subr.mxu0 0.0
    %234 = vmatpush1.msra.mxu0 0.0
    %235 = vmatprep.subr.mxu0 0.0
    %236 = vmatpush1.msra.mxu0 0.0
    %237 = vmatprep.subr.mxu0 0.0
    %238 = vmatpush1.msra.mxu0 0.0
    %239 = vmatprep.subr.mxu0 0.0
    %240 = vmatpush1.msra.mxu0 0.0
    %241 = vmatprep.subr.mxu0 0.0
    %242 = vmatpush1.msra.mxu0 0.0
    %243 = vmatprep.subr.mxu0 0.0
    %244 = vmatpush1.msra.mxu0 0.0
    %245 = vmatprep.subr.mxu0 0.0
    %246 = vmatpush1.msra.mxu0 0.0
    %247 = vmatprep.subr.mxu0 0.0
    %248 = vmatpush1.msra.mxu0 0.0
    %249 = vmatprep.subr.mxu0 0.0
    %250 = vmatpush1.msra.mxu0 0.0
    %251 = vmatprep.subr.mxu0 0.0
    %252 = vmatpush1.msra.mxu0 0.0
    %253 = vmatprep.subr.mxu0 0.0
    %254 = vmatpush1.msra.mxu0 0.0
    %255 = vmatprep.subr.mxu0 0.0
    %256 = vmatpush1.msra.mxu0 0.0
    %257 = vmatprep.subr.mxu0 0.0
    %258 = vmatpush1.msra.mxu0 0.0
    %259 = vmatprep.subr.mxu0 0.0
    %260 = vmatpush1.msra.mxu0 0.0
    %261 = vmatprep.subr.mxu0 0.0
    %262 = vmatpush1.msra.mxu0 0.0
    %263 = vmatprep.subr.mxu0 0.0
    %264 = vmatpush1.msra.mxu0 0.0
    %265 = vmatprep.subr.mxu0 0.0
    %266 = vmatpush1.msra.mxu0 0.0
    %267 = vmatprep.subr.mxu0 0.0
    %268 = vmatpush1.msra.mxu0 0.0
    %269 = vmatprep.subr.mxu0 0.0
    %270 = vmatpush1.msra.mxu0 0.0
    %271 = vmatprep.subr.mxu0 0.0
    %272 = vmatpush1.msra.mxu0 0.0
    %273 = vmatprep.subr.mxu0 0.0
    %274 = vmatpush1.msra.mxu0 0.0
    %275 = vmatprep.subr.mxu0 0.0
    %276 = vmatpush1.msra.mxu0 0.0
    %277 = vmatprep.subr.mxu0 0.0
    %278 = vmatpush1.msra.mxu0 0.0
    %279 = vmatprep.mubr.f32.mxu0 0.0
    %280 = vmatmul.mubr.f32.gmra.mrb[0].mxu0 %v133
    %v281 = vpop.f32.mrb[0].mxu0
    %v282 = vadd.f32 %v122, %v281
    %v283 = vpop.f32.mrb[0].mxu0
    %v284 = vadd.f32 %v126, %v283
    %285 = vmatprep.mubr.f32.mxu0 0.0
    %286 = vmatmul.mubr.f32.gmra.mrb[0].mxu0 %v136
    %v287 = vpop.f32.mrb[0].mxu0
    %v288 = vadd.f32 %v122, %v287
    %v289 = vpop.f32.mrb[0].mxu0
    %v290 = vadd.f32 %v126, %v289
    %291 = vdwg.mxu0
    %v292 = vmax.f32 %v205, 0.0
    %v293 = vmax.f32 %v207, 0.0
    %v294 = vmax.f32 %v282, 0.0
    %v295 = vmax.f32 %v284, 0.0
    %v296 = vmax.f32 %v211, 0.0
    %v297 = vmax.f32 %v213, 0.0
    %v298 = vmax.f32 %v288, 0.0
    %v299 = vmax.f32 %v290, 0.0
    %v300 = vld [vmem:[#allocation6] sm:$0xff]
    %v301 = vld [vmem:[#allocation6 + $0x8] sm:$0xff]
    %v302 = vld [vmem:[#allocation6 + $0x10] sm:$0xff]
    %v303 = vld [vmem:[#allocation6 + $0x18] sm:$0xff]
    %v304 = vld [vmem:[#allocation6 + $0x20] sm:$0xff]
    %v305 = vld [vmem:[#allocation6 + $0x28] sm:$0xff]
    %v306 = vld [vmem:[#allocation6 + $0x30] sm:$0xff]
    %v307 = vld [vmem:[#allocation6 + $0x38] sm:$0xff]
    %v308 = vld [vmem:[#allocation6 + $0x40] sm:$0xff]
    %v309 = vld [vmem:[#allocation6 + $0x48] sm:$0xff]
    %v310 = vld [vmem:[#allocation6 + $0x50] sm:$0xff]
    %v311 = vld [vmem:[#allocation6 + $0x58] sm:$0xff]
    %v312 = vld [vmem:[#allocation6 + $0x60] sm:$0xff]
    %v313 = vld [vmem:[#allocation6 + $0x68] sm:$0xff]
    %v314 = vld [vmem:[#allocation6 + $0x70] sm:$0xff]
    %v315 = vld [vmem:[#allocation6 + $0x78] sm:$0xff]
    %v316 = vld [vmem:[#allocation6 + $0x80] sm:$0xff]
    %v317 = vld [vmem:[#allocation6 + $0x88] sm:$0xff]
    %v318 = vld [vmem:[#allocation6 + $0x90] sm:$0xff]
    %v319 = vld [vmem:[#allocation6 + $0x98] sm:$0xff]
    %v320 = vld [vmem:[#allocation6 + $0xa0] sm:$0xff]
    %v321 = vld [vmem:[#allocation6 + $0xa8] sm:$0xff]
    %v322 = vld [vmem:[#allocation6 + $0xb0] sm:$0xff]
    %v323 = vld [vmem:[#allocation6 + $0xb8] sm:$0xff]
    %v324 = vld [vmem:[#allocation6 + $0xc0] sm:$0xff]
    %v325 = vld [vmem:[#allocation6 + $0xc8] sm:$0xff]
    %v326 = vld [vmem:[#allocation6 + $0xd0] sm:$0xff]
    %v327 = vld [vmem:[#allocation6 + $0xd8] sm:$0xff]
    %v328 = vld [vmem:[#allocation6 + $0xe0] sm:$0xff]
    %v329 = vld [vmem:[#allocation6 + $0xe8] sm:$0xff]
    %v330 = vld [vmem:[#allocation6 + $0xf0] sm:$0xff]
    %v331 = vld [vmem:[#allocation6 + $0xf8] sm:$0xff]
    %v332 = vld [vmem:[#allocation6 + $0x100] sm:$0xff]
    %v333 = vld [vmem:[#allocation6 + $0x108] sm:$0xff]
    %v334 = vld [vmem:[#allocation6 + $0x110] sm:$0xff]
    %v335 = vld [vmem:[#allocation6 + $0x118] sm:$0xff]
    %v336 = vld [vmem:[#allocation6 + $0x120] sm:$0xff]
    %v337 = vld [vmem:[#allocation6 + $0x128] sm:$0xff]
    %v338 = vld [vmem:[#allocation6 + $0x130] sm:$0xff]
    %v339 = vld [vmem:[#allocation6 + $0x138] sm:$0xff]
    %v340 = vld [vmem:[#allocation6 + $0x140] sm:$0xff]
    %v341 = vld [vmem:[#allocation6 + $0x148] sm:$0xff]
    %v342 = vld [vmem:[#allocation6 + $0x150] sm:$0xff]
    %v343 = vld [vmem:[#allocation6 + $0x158] sm:$0xff]
    %v344 = vld [vmem:[#allocation6 + $0x160] sm:$0xff]
    %v345 = vld [vmem:[#allocation6 + $0x168] sm:$0xff]
    %v346 = vld [vmem:[#allocation6 + $0x170] sm:$0xff]
    %v347 = vld [vmem:[#allocation6 + $0x178] sm:$0xff]
    %v348 = vld [vmem:[#allocation6 + $0x180] sm:$0xff]
    %v349 = vld [vmem:[#allocation6 + $0x188] sm:$0xff]
    %v350 = vld [vmem:[#allocation6 + $0x190] sm:$0xff]
    %v351 = vld [vmem:[#allocation6 + $0x198] sm:$0xff]
    %v352 = vld [vmem:[#allocation6 + $0x1a0] sm:$0xff]
    %v353 = vld [vmem:[#allocation6 + $0x1a8] sm:$0xff]
    %v354 = vld [vmem:[#allocation6 + $0x1b0] sm:$0xff]
    %v355 = vld [vmem:[#allocation6 + $0x1b8] sm:$0xff]
    %v356 = vld [vmem:[#allocation6 + $0x1c0] sm:$0xff]
    %v357 = vld [vmem:[#allocation6 + $0x1c8] sm:$0xff]
    %v358 = vld [vmem:[#allocation6 + $0x1d0] sm:$0xff]
    %v359 = vld [vmem:[#allocation6 + $0x1d8] sm:$0xff]
    %v360 = vld [vmem:[#allocation6 + $0x1e0] sm:$0xff]
    %v361 = vld [vmem:[#allocation6 + $0x1e8] sm:$0xff]
    %v362 = vld [vmem:[#allocation6 + $0x1f0] sm:$0xff]
    %v363 = vld [vmem:[#allocation6 + $0x1f8] sm:$0xff]
    %v364 = vld [vmem:[#allocation6 + $0x200] sm:$0xff]
    %v365 = vld [vmem:[#allocation6 + $0x208] sm:$0xff]
    %v366 = vld [vmem:[#allocation6 + $0x210] sm:$0xff]
    %v367 = vld [vmem:[#allocation6 + $0x218] sm:$0xff]
    %v368 = vld [vmem:[#allocation6 + $0x220] sm:$0xff]
    %v369 = vld [vmem:[#allocation6 + $0x228] sm:$0xff]
    %v370 = vld [vmem:[#allocation6 + $0x230] sm:$0xff]
    %v371 = vld [vmem:[#allocation6 + $0x238] sm:$0xff]
    %v372 = vld [vmem:[#allocation6 + $0x240] sm:$0xff]
    %v373 = vld [vmem:[#allocation6 + $0x248] sm:$0xff]
    %v374 = vld [vmem:[#allocation6 + $0x250] sm:$0xff]
    %v375 = vld [vmem:[#allocation6 + $0x258] sm:$0xff]
    %v376 = vld [vmem:[#allocation6 + $0x260] sm:$0xff]
    %v377 = vld [vmem:[#allocation6 + $0x268] sm:$0xff]
    %v378 = vld [vmem:[#allocation6 + $0x270] sm:$0xff]
    %v379 = vld [vmem:[#allocation6 + $0x278] sm:$0xff]
    %v380 = vld [vmem:[#allocation6 + $0x280] sm:$0xff]
    %v381 = vld [vmem:[#allocation6 + $0x288] sm:$0xff]
    %v382 = vld [vmem:[#allocation6 + $0x290] sm:$0xff]
    %v383 = vld [vmem:[#allocation6 + $0x298] sm:$0xff]
    %v384 = vld [vmem:[#allocation6 + $0x2a0] sm:$0xff]
    %v385 = vld [vmem:[#allocation6 + $0x2a8] sm:$0xff]
    %v386 = vld [vmem:[#allocation6 + $0x2b0] sm:$0xff]
    %v387 = vld [vmem:[#allocation6 + $0x2b8] sm:$0xff]
    %v388 = vld [vmem:[#allocation6 + $0x2c0] sm:$0xff]
    %v389 = vld [vmem:[#allocation6 + $0x2c8] sm:$0xff]
    %v390 = vld [vmem:[#allocation6 + $0x2d0] sm:$0xff]
    %v391 = vld [vmem:[#allocation6 + $0x2d8] sm:$0xff]
    %v392 = vld [vmem:[#allocation6 + $0x2e0] sm:$0xff]
    %v393 = vld [vmem:[#allocation6 + $0x2e8] sm:$0xff]
    %v394 = vld [vmem:[#allocation6 + $0x2f0] sm:$0xff]
    %v395 = vld [vmem:[#allocation6 + $0x2f8] sm:$0xff]
    %v396 = vld [vmem:[#allocation6 + $0x300] sm:$0xff]
    %v397 = vld [vmem:[#allocation6 + $0x308] sm:$0xff]
    %v398 = vld [vmem:[#allocation6 + $0x310] sm:$0xff]
    %v399 = vld [vmem:[#allocation6 + $0x318] sm:$0xff]
    %v400 = vld [vmem:[#allocation6 + $0x320] sm:$0xff]
    %v401 = vld [vmem:[#allocation6 + $0x328] sm:$0xff]
    %v402 = vld [vmem:[#allocation6 + $0x330] sm:$0xff]
    %v403 = vld [vmem:[#allocation6 + $0x338] sm:$0xff]
    %v404 = vld [vmem:[#allocation6 + $0x340] sm:$0xff]
    %v405 = vld [vmem:[#allocation6 + $0x348] sm:$0xff]
    %v406 = vld [vmem:[#allocation6 + $0x350] sm:$0xff]
    %v407 = vld [vmem:[#allocation6 + $0x358] sm:$0xff]
    %v408 = vld [vmem:[#allocation6 + $0x360] sm:$0xff]
    %v409 = vld [vmem:[#allocation6 + $0x368] sm:$0xff]
    %v410 = vld [vmem:[#allocation6 + $0x370] sm:$0xff]
    %v411 = vld [vmem:[#allocation6 + $0x378] sm:$0xff]
    %v412 = vld [vmem:[#allocation6 + $0x380] sm:$0xff]
    %v413 = vld [vmem:[#allocation6 + $0x388] sm:$0xff]
    %v414 = vld [vmem:[#allocation6 + $0x390] sm:$0xff]
    %v415 = vld [vmem:[#allocation6 + $0x398] sm:$0xff]
    %v416 = vld [vmem:[#allocation6 + $0x3a0] sm:$0xff]
    %v417 = vld [vmem:[#allocation6 + $0x3a8] sm:$0xff]
    %v418 = vld [vmem:[#allocation6 + $0x3b0] sm:$0xff]
    %v419 = vld [vmem:[#allocation6 + $0x3b8] sm:$0xff]
    %v420 = vld [vmem:[#allocation6 + $0x3c0] sm:$0xff]
    %v421 = vld [vmem:[#allocation6 + $0x3c8] sm:$0xff]
    %v422 = vld [vmem:[#allocation6 + $0x3d0] sm:$0xff]
    %v423 = vld [vmem:[#allocation6 + $0x3d8] sm:$0xff]
    %v424 = vld [vmem:[#allocation6 + $0x3e0] sm:$0xff]
    %v425 = vld [vmem:[#allocation6 + $0x3e8] sm:$0xff]
    %v426 = vld [vmem:[#allocation6 + $0x3f0] sm:$0xff]
    %v427 = vld [vmem:[#allocation6 + $0x3f8] sm:$0xff]
    %v428 = vld [vmem:[%s5 + $0x4] sm:$0x3]
    %v430 = vlaneseq
    %v431 = vshrl.u32 %v430, 7
    %v432 = vsub.s32 0, %v431
    %v433 = vrot.slane %v428, %v432
    %v434 = vlaneseq
    %v435 = vshrl.u32 %v434, 7
    %v436 = vsub.s32 1, %v435
    %v437 = vrot.slane %v428, %v436
    %440 = vmatprep.subr.mxu0 %v301
    %441 = vmatpush1.msra.mxu0 %v300
    %442 = vmatprep.subr.mxu0 %v303
    %443 = vmatpush1.msra.mxu0 %v302
    %444 = vmatprep.subr.mxu0 %v305
    %445 = vmatpush1.msra.mxu0 %v304
    %446 = vmatprep.subr.mxu0 %v307
    %447 = vmatpush1.msra.mxu0 %v306
    %448 = vmatprep.subr.mxu0 %v309
    %449 = vmatpush1.msra.mxu0 %v308
    %450 = vmatprep.subr.mxu0 %v311
    %451 = vmatpush1.msra.mxu0 %v310
    %452 = vmatprep.subr.mxu0 %v313
    %453 = vmatpush1.msra.mxu0 %v312
    %454 = vmatprep.subr.mxu0 %v315
    %455 = vmatpush1.msra.mxu0 %v314
    %456 = vmatprep.subr.mxu0 %v317
    %457 = vmatpush1.msra.mxu0 %v316
    %458 = vmatprep.subr.mxu0 %v319
    %459 = vmatpush1.msra.mxu0 %v318
    %460 = vmatprep.subr.mxu0 %v321
    %461 = vmatpush1.msra.mxu0 %v320
    %462 = vmatprep.subr.mxu0 %v323
    %463 = vmatpush1.msra.mxu0 %v322
    %464 = vmatprep.subr.mxu0 %v325
    %465 = vmatpush1.msra.mxu0 %v324
    %466 = vmatprep.subr.mxu0 %v327
    %467 = vmatpush1.msra.mxu0 %v326
    %468 = vmatprep.subr.mxu0 %v329
    %469 = vmatpush1.msra.mxu0 %v328
    %470 = vmatprep.subr.mxu0 %v331
    %471 = vmatpush1.msra.mxu0 %v330
    %472 = vmatprep.subr.mxu0 %v333
    %473 = vmatpush1.msra.mxu0 %v332
    %474 = vmatprep.subr.mxu0 %v335
    %475 = vmatpush1.msra.mxu0 %v334
    %476 = vmatprep.subr.mxu0 %v337
    %477 = vmatpush1.msra.mxu0 %v336
    %478 = vmatprep.subr.mxu0 %v339
    %479 = vmatpush1.msra.mxu0 %v338
    %480 = vmatprep.subr.mxu0 %v341
    %481 = vmatpush1.msra.mxu0 %v340
    %482 = vmatprep.subr.mxu0 %v343
    %483 = vmatpush1.msra.mxu0 %v342
    %484 = vmatprep.subr.mxu0 %v345
    %485 = vmatpush1.msra.mxu0 %v344
    %486 = vmatprep.subr.mxu0 %v347
    %487 = vmatpush1.msra.mxu0 %v346
    %488 = vmatprep.subr.mxu0 %v349
    %489 = vmatpush1.msra.mxu0 %v348
    %490 = vmatprep.subr.mxu0 %v351
    %491 = vmatpush1.msra.mxu0 %v350
    %492 = vmatprep.subr.mxu0 %v353
    %493 = vmatpush1.msra.mxu0 %v352
    %494 = vmatprep.subr.mxu0 %v355
    %495 = vmatpush1.msra.mxu0 %v354
    %496 = vmatprep.subr.mxu0 %v357
    %497 = vmatpush1.msra.mxu0 %v356
    %498 = vmatprep.subr.mxu0 %v359
    %499 = vmatpush1.msra.mxu0 %v358
    %500 = vmatprep.subr.mxu0 %v361
    %501 = vmatpush1.msra.mxu0 %v360
    %502 = vmatprep.subr.mxu0 %v363
    %503 = vmatpush1.msra.mxu0 %v362
    %504 = vmatprep.mubr.f32.mxu0 %v293
    %505 = vmatmul.mubr.f32.gmra.mrb[0].mxu0 %v292
    %v506 = vpop.f32.mrb[0].mxu0
    %v507 = vadd.f32 %v433, %v506
    %v508 = vpop.f32.mrb[0].mxu0
    %v509 = vadd.f32 %v437, %v508
    %510 = vmatprep.mubr.f32.mxu0 %v297
    %511 = vmatmul.mubr.f32.gmra.mrb[0].mxu0 %v296
    %v512 = vpop.f32.mrb[0].mxu0
    %v513 = vadd.f32 %v433, %v512
    %v514 = vpop.f32.mrb[0].mxu0
    %v515 = vadd.f32 %v437, %v514
    %516 = vdwg.mxu0
    %517 = vmatprep.subr.mxu0 %v365
    %518 = vmatpush1.msra.mxu0 %v364
    %519 = vmatprep.subr.mxu0 %v367
    %520 = vmatpush1.msra.mxu0 %v366
    %521 = vmatprep.subr.mxu0 %v369
    %522 = vmatpush1.msra.mxu0 %v368
    %523 = vmatprep.subr.mxu0 %v371
    %524 = vmatpush1.msra.mxu0 %v370
    %525 = vmatprep.subr.mxu0 %v373
    %526 = vmatpush1.msra.mxu0 %v372
    %527 = vmatprep.subr.mxu0 %v375
    %528 = vmatpush1.msra.mxu0 %v374
    %529 = vmatprep.subr.mxu0 %v377
    %530 = vmatpush1.msra.mxu0 %v376
    %531 = vmatprep.subr.mxu0 %v379
    %532 = vmatpush1.msra.mxu0 %v378
    %533 = vmatprep.subr.mxu0 %v381
    %534 = vmatpush1.msra.mxu0 %v380
    %535 = vmatprep.subr.mxu0 %v383
    %536 = vmatpush1.msra.mxu0 %v382
    %537 = vmatprep.subr.mxu0 %v385
    %538 = vmatpush1.msra.mxu0 %v384
    %539 = vmatprep.subr.mxu0 %v387
    %540 = vmatpush1.msra.mxu0 %v386
    %541 = vmatprep.subr.mxu0 %v389
    %542 = vmatpush1.msra.mxu0 %v388
    %543 = vmatprep.subr.mxu0 %v391
    %544 = vmatpush1.msra.mxu0 %v390
    %545 = vmatprep.subr.mxu0 %v393
    %546 = vmatpush1.msra.mxu0 %v392
    %547 = vmatprep.subr.mxu0 %v395
    %548 = vmatpush1.msra.mxu0 %v394
    %549 = vmatprep.subr.mxu0 %v397
    %550 = vmatpush1.msra.mxu0 %v396
    %551 = vmatprep.subr.mxu0 %v399
    %552 = vmatpush1.msra.mxu0 %v398
    %553 = vmatprep.subr.mxu0 %v401
    %554 = vmatpush1.msra.mxu0 %v400
    %555 = vmatprep.subr.mxu0 %v403
    %556 = vmatpush1.msra.mxu0 %v402
    %557 = vmatprep.subr.mxu0 %v405
    %558 = vmatpush1.msra.mxu0 %v404
    %559 = vmatprep.subr.mxu0 %v407
    %560 = vmatpush1.msra.mxu0 %v406
    %561 = vmatprep.subr.mxu0 %v409
    %562 = vmatpush1.msra.mxu0 %v408
    %563 = vmatprep.subr.mxu0 %v411
    %564 = vmatpush1.msra.mxu0 %v410
    %565 = vmatprep.subr.mxu0 %v413
    %566 = vmatpush1.msra.mxu0 %v412
    %567 = vmatprep.subr.mxu0 %v415
    %568 = vmatpush1.msra.mxu0 %v414
    %569 = vmatprep.subr.mxu0 %v417
    %570 = vmatpush1.msra.mxu0 %v416
    %571 = vmatprep.subr.mxu0 %v419
    %572 = vmatpush1.msra.mxu0 %v418
    %573 = vmatprep.subr.mxu0 %v421
    %574 = vmatpush1.msra.mxu0 %v420
    %575 = vmatprep.subr.mxu0 %v423
    %576 = vmatpush1.msra.mxu0 %v422
    %577 = vmatprep.subr.mxu0 %v425
    %578 = vmatpush1.msra.mxu0 %v424
    %579 = vmatprep.subr.mxu0 %v427
    %580 = vmatpush1.msra.mxu0 %v426
    %581 = vmatprep.mubr.f32.mxu0 %v295
    %582 = vmatmul.mubr.f32.gmra.mrb[0].mxu0 %v294
    %v583 = vpop.f32.mrb[0].mxu0
    %v584 = vadd.f32 %v507, %v583
    %v585 = vpop.f32.mrb[0].mxu0
    %v586 = vadd.f32 %v509, %v585
    %587 = vmatprep.mubr.f32.mxu0 %v299
    %588 = vmatmul.mubr.f32.gmra.mrb[0].mxu0 %v298
    %v589 = vpop.f32.mrb[0].mxu0
    %v590 = vadd.f32 %v513, %v589
    %v591 = vpop.f32.mrb[0].mxu0
    %v592 = vadd.f32 %v515, %v591
    %593 = vdwg.mxu0
    %v594 = vmax.f32 %v584, 0.0
    %v595 = vmax.f32 %v586, 0.0
    %v596 = vmax.f32 %v590, 0.0
    %v597 = vmax.f32 %v592, 0.0
    %v598 = vld [vmem:[#allocation7] sm:$0xff]
    %v599 = vld [vmem:[#allocation7 + $0x8] sm:$0xff]
    %v600 = vld [vmem:[#allocation7 + $0x10] sm:$0xff]
    %v601 = vld [vmem:[#allocation7 + $0x18] sm:$0xff]
    %v602 = vld [vmem:[#allocation7 + $0x20] sm:$0xff]
    %v603 = vld [vmem:[#allocation7 + $0x28] sm:$0xff]
    %v604 = vld [vmem:[#allocation7 + $0x30] sm:$0xff]
    %v605 = vld [vmem:[#allocation7 + $0x38] sm:$0xff]
    %v606 = vld [vmem:[#allocation7 + $0x40] sm:$0xff]
    %v607 = vld [vmem:[#allocation7 + $0x48] sm:$0xff]
    %v608 = vld [vmem:[#allocation7 + $0x50] sm:$0xff]
    %v609 = vld [vmem:[#allocation7 + $0x58] sm:$0xff]
    %v610 = vld [vmem:[#allocation7 + $0x60] sm:$0xff]
    %v611 = vld [vmem:[#allocation7 + $0x68] sm:$0xff]
    %v612 = vld [vmem:[#allocation7 + $0x70] sm:$0xff]
    %v613 = vld [vmem:[#allocation7 + $0x78] sm:$0xff]
    %v614 = vld [vmem:[#allocation7 + $0x80] sm:$0xff]
    %v615 = vld [vmem:[#allocation7 + $0x88] sm:$0xff]
    %v616 = vld [vmem:[#allocation7 + $0x90] sm:$0xff]
    %v617 = vld [vmem:[#allocation7 + $0x98] sm:$0xff]
    %v618 = vld [vmem:[#allocation7 + $0xa0] sm:$0xff]
    %v619 = vld [vmem:[#allocation7 + $0xa8] sm:$0xff]
    %v620 = vld [vmem:[#allocation7 + $0xb0] sm:$0xff]
    %v621 = vld [vmem:[#allocation7 + $0xb8] sm:$0xff]
    %v622 = vld [vmem:[#allocation7 + $0xc0] sm:$0xff]
    %v623 = vld [vmem:[#allocation7 + $0xc8] sm:$0xff]
    %v624 = vld [vmem:[#allocation7 + $0xd0] sm:$0xff]
    %v625 = vld [vmem:[#allocation7 + $0xd8] sm:$0xff]
    %v626 = vld [vmem:[#allocation7 + $0xe0] sm:$0xff]
    %v627 = vld [vmem:[#allocation7 + $0xe8] sm:$0xff]
    %v628 = vld [vmem:[#allocation7 + $0xf0] sm:$0xff]
    %v629 = vld [vmem:[#allocation7 + $0xf8] sm:$0xff]
    %v630 = vld [vmem:[%s5 + $0x6] sm:$0x1]
    %v632 = vlaneseq
    %v633 = vshrl.u32 %v632, 7
    %v634 = vsub.s32 0, %v633
    %v635 = vrot.slane %v630, %v634
    %637 = vmatprep.subr.mxu0 0.0
    %638 = vmatpush1.msra.mxu0 %v598
    %639 = vmatprep.subr.mxu0 0.0
    %640 = vmatpush1.msra.mxu0 %v599
    %641 = vmatprep.subr.mxu0 0.0
    %642 = vmatpush1.msra.mxu0 %v600
    %643 = vmatprep.subr.mxu0 0.0
    %644 = vmatpush1.msra.mxu0 %v601
    %645 = vmatprep.subr.mxu0 0.0
    %646 = vmatpush1.msra.mxu0 %v602
    %647 = vmatprep.subr.mxu0 0.0
    %648 = vmatpush1.msra.mxu0 %v603
    %649 = vmatprep.subr.mxu0 0.0
    %650 = vmatpush1.msra.mxu0 %v604
    %651 = vmatprep.subr.mxu0 0.0
    %652 = vmatpush1.msra.mxu0 %v605
    %653 = vmatprep.subr.mxu0 0.0
    %654 = vmatpush1.msra.mxu0 %v606
    %655 = vmatprep.subr.mxu0 0.0
    %656 = vmatpush1.msra.mxu0 %v607
    %657 = vmatprep.subr.mxu0 0.0
    %658 = vmatpush1.msra.mxu0 %v608
    %659 = vmatprep.subr.mxu0 0.0
    %660 = vmatpush1.msra.mxu0 %v609
    %661 = vmatprep.subr.mxu0 0.0
    %662 = vmatpush1.msra.mxu0 %v610
    %663 = vmatprep.subr.mxu0 0.0
    %664 = vmatpush1.msra.mxu0 %v611
    %665 = vmatprep.subr.mxu0 0.0
    %666 = vmatpush1.msra.mxu0 %v612
    %667 = vmatprep.subr.mxu0 0.0
    %668 = vmatpush1.msra.mxu0 %v613
    %669 = vmatprep.subr.mxu0 0.0
    %670 = vmatpush1.msra.mxu0 %v614
    %671 = vmatprep.subr.mxu0 0.0
    %672 = vmatpush1.msra.mxu0 %v615
    %673 = vmatprep.subr.mxu0 0.0
    %674 = vmatpush1.msra.mxu0 %v616
    %675 = vmatprep.subr.mxu0 0.0
    %676 = vmatpush1.msra.mxu0 %v617
    %677 = vmatprep.subr.mxu0 0.0
    %678 = vmatpush1.msra.mxu0 %v618
    %679 = vmatprep.subr.mxu0 0.0
    %680 = vmatpush1.msra.mxu0 %v619
    %681 = vmatprep.subr.mxu0 0.0
    %682 = vmatpush1.msra.mxu0 %v620
    %683 = vmatprep.subr.mxu0 0.0
    %684 = vmatpush1.msra.mxu0 %v621
    %685 = vmatprep.subr.mxu0 0.0
    %686 = vmatpush1.msra.mxu0 %v622
    %687 = vmatprep.subr.mxu0 0.0
    %688 = vmatpush1.msra.mxu0 %v623
    %689 = vmatprep.subr.mxu0 0.0
    %690 = vmatpush1.msra.mxu0 %v624
    %691 = vmatprep.subr.mxu0 0.0
    %692 = vmatpush1.msra.mxu0 %v625
    %693 = vmatprep.subr.mxu0 0.0
    %694 = vmatpush1.msra.mxu0 %v626
    %695 = vmatprep.subr.mxu0 0.0
    %696 = vmatpush1.msra.mxu0 %v627
    %697 = vmatprep.subr.mxu0 0.0
    %698 = vmatpush1.msra.mxu0 %v628
    %699 = vmatprep.subr.mxu0 0.0
    %700 = vmatpush1.msra.mxu0 %v629
    %701 = vmatprep.mubr.f32.mxu0 %v595
    %702 = vmatmul.mubr.f32.gmra.mrb[0].mxu0 %v594
    %v703 = vpop.f32.mrb[0].mxu0
    %v704 = vadd.f32 %v635, %v703
    %v705 = vpop.f32.mrb[0].mxu0
    %706 = vmatprep.mubr.f32.mxu0 %v597
    %707 = vmatmul.mubr.f32.gmra.mrb[0].mxu0 %v596
    %v708 = vpop.f32.mrb[0].mxu0
    %v709 = vadd.f32 %v635, %v708
    %v710 = vpop.f32.mrb[0].mxu0
    %711 = vdwg.mxu0
    %v712 = vmax.f32 %v704, 0.0
    %v713 = vmax.f32 %v709, 0.0
    %v714 = vld [vmem:[#allocation9] sm:$0xff]
    %v715 = vld [vmem:[#allocation9 + $0x8] sm:$0xff]
    %v716 = vld [vmem:[#allocation9 + $0x10] sm:$0xff]
    %v717 = vld [vmem:[#allocation9 + $0x18] sm:$0xff]
    %v718 = vld [vmem:[#allocation9 + $0x20] sm:$0xff]
    %v719 = vld [vmem:[#allocation9 + $0x28] sm:$0xff]
    %v720 = vld [vmem:[#allocation9 + $0x30] sm:$0xff]
    %v721 = vld [vmem:[#allocation9 + $0x38] sm:$0xff]
    %v722 = vld [vmem:[#allocation9 + $0x40] sm:$0xff]
    %v723 = vld [vmem:[#allocation9 + $0x48] sm:$0xff]
    %v724 = vld [vmem:[#allocation9 + $0x50] sm:$0xff]
    %v725 = vld [vmem:[#allocation9 + $0x58] sm:$0xff]
    %v726 = vld [vmem:[#allocation9 + $0x60] sm:$0xff]
    %v727 = vld [vmem:[#allocation9 + $0x68] sm:$0xff]
    %v728 = vld [vmem:[#allocation9 + $0x70] sm:$0xff]
    %v729 = vld [vmem:[#allocation9 + $0x78] sm:$0xff]
    %v730 = vld [vmem:[%s5 + $0x7] sm:$0x1]
    %v732 = vlaneseq
    %v733 = vshrl.u32 %v732, 7
    %v734 = vsub.s32 0, %v733
    %v735 = vrot.slane %v730, %v734
    %737 = vmatprep.subr.mxu0 0.0
    %738 = vmatpush1.msra.mxu0 %v714
    %739 = vmatprep.subr.mxu0 0.0
    %740 = vmatpush1.msra.mxu0 %v715
    %741 = vmatprep.subr.mxu0 0.0
    %742 = vmatpush1.msra.mxu0 %v716
    %743 = vmatprep.subr.mxu0 0.0
    %744 = vmatpush1.msra.mxu0 %v717
    %745 = vmatprep.subr.mxu0 0.0
    %746 = vmatpush1.msra.mxu0 %v718
    %747 = vmatprep.subr.mxu0 0.0
    %748 = vmatpush1.msra.mxu0 %v719
    %749 = vmatprep.subr.mxu0 0.0
    %750 = vmatpush1.msra.mxu0 %v720
    %751 = vmatprep.subr.mxu0 0.0
    %752 = vmatpush1.msra.mxu0 %v721
    %753 = vmatprep.subr.mxu0 0.0
    %754 = vmatpush1.msra.mxu0 %v722
    %755 = vmatprep.subr.mxu0 0.0
    %756 = vmatpush1.msra.mxu0 %v723
    %757 = vmatprep.subr.mxu0 0.0
    %758 = vmatpush1.msra.mxu0 %v724
    %759 = vmatprep.subr.mxu0 0.0
    %760 = vmatpush1.msra.mxu0 %v725
    %761 = vmatprep.subr.mxu0 0.0
    %762 = vmatpush1.msra.mxu0 %v726
    %763 = vmatprep.subr.mxu0 0.0
    %764 = vmatpush1.msra.mxu0 %v727
    %765 = vmatprep.subr.mxu0 0.0
    %766 = vmatpush1.msra.mxu0 %v728
    %767 = vmatprep.subr.mxu0 0.0
    %768 = vmatpush1.msra.mxu0 %v729
    %769 = vmatprep.subr.mxu0 0.0
    %770 = vmatpush1.msra.mxu0 0.0
    %771 = vmatprep.subr.mxu0 0.0
    %772 = vmatpush1.msra.mxu0 0.0
    %773 = vmatprep.subr.mxu0 0.0
    %774 = vmatpush1.msra.mxu0 0.0
    %775 = vmatprep.subr.mxu0 0.0
    %776 = vmatpush1.msra.mxu0 0.0
    %777 = vmatprep.subr.mxu0 0.0
    %778 = vmatpush1.msra.mxu0 0.0
    %779 = vmatprep.subr.mxu0 0.0
    %780 = vmatpush1.msra.mxu0 0.0
    %781 = vmatprep.subr.mxu0 0.0
    %782 = vmatpush1.msra.mxu0 0.0
    %783 = vmatprep.subr.mxu0 0.0
    %784 = vmatpush1.msra.mxu0 0.0
    %785 = vmatprep.subr.mxu0 0.0
    %786 = vmatpush1.msra.mxu0 0.0
    %787 = vmatprep.subr.mxu0 0.0
    %788 = vmatpush1.msra.mxu0 0.0
    %789 = vmatprep.subr.mxu0 0.0
    %790 = vmatpush1.msra.mxu0 0.0
    %791 = vmatprep.subr.mxu0 0.0
    %792 = vmatpush1.msra.mxu0 0.0
    %793 = vmatprep.subr.mxu0 0.0
    %794 = vmatpush1.msra.mxu0 0.0
    %795 = vmatprep.subr.mxu0 0.0
    %796 = vmatpush1.msra.mxu0 0.0
    %797 = vmatprep.subr.mxu0 0.0
    %798 = vmatpush1.msra.mxu0 0.0
    %799 = vmatprep.subr.mxu0 0.0
    %800 = vmatpush1.msra.mxu0 0.0
    %801 = vmatprep.mubr.f32.mxu0 0.0
    %802 = vmatmul.mubr.f32.gmra.mrb[0].mxu0 %v712
    %v803 = vpop.f32.mrb[0].mxu0
    %v804 = vadd.f32 %v735, %v803
    %v805 = vpop.f32.mrb[0].mxu0
    %806 = vmatprep.mubr.f32.mxu0 0.0
    %807 = vmatmul.mubr.f32.gmra.mrb[0].mxu0 %v713
    %v808 = vpop.f32.mrb[0].mxu0
    %v809 = vadd.f32 %v735, %v808
    %v810 = vpop.f32.mrb[0].mxu0
    %811 = vdwg.mxu0
    %vm812 = vcmask 7168
    %813 = vst.msk [vmem:[%s6] sm:$0xff] %vm812, %v804
    %814 = vst.msk [vmem:[%s6 + $0x8] sm:$0xff] %vm812, %v809
    // Predicated region
    $region46: #{net_forward.1} parent=1 // pred_check
      _
    $region47: #{net_forward.1} parent=1 // pred_check_branch
      %816 = sbr.rel (0) target = $region49
    $region48: #{net_forward.1} parent=1 // pred_region
      _
    $region49: #{net_forward.1} parent=1 // pred_fallthru
      _
    // Predicated region
    $region50: #{net_forward.1} parent=1 // pred_check
      _
    $region51: #{net_forward.1} parent=1 // pred_check_branch
      %818 = sbr.rel (0) target = $region53
    $region52: #{net_forward.1} parent=1 // pred_region
      _
    $region53: #{net_forward.1} parent=1 // pred_fallthru
      _
    %819 = vsyncpa [#allocation3], 1
    %820 = vsyncpa [#allocation5], 1
    %821 = vsyncpa [#allocation8], 1

</llo_original>
